<compile_context>
chip_gen: v5e
topology: v5e:2x2
jax: 0.10.0
libtpu: 0.0.40
codegen_flags: <defaults>
</compile_context>

<pallas_src>
import jax
import jax.numpy as jnp
from jax.experimental import pallas as pl
from jax.experimental.pallas import tpu as pltpu


def _round_up(x, m):
    return ((x + m - 1) // m) * m


# ----------------------------------------------------------------------------
# Fused Pallas kernel: 1x1x1 conv (channel matmul, BN scale folded) + shift
# + ReLU
# ----------------------------------------------------------------------------
def _gating_kernel(x_ref, w_ref, sh_ref, o_ref):
    # x_ref : (1, Cin, TS)   activations; spatial tile lives in the lane dim
    # w_ref : (Cout, Cin)    conv weights with BN scale pre-folded
    # sh_ref: (Cout, 1)      f32 fused shift (conv bias + BN mean/beta)
    # o_ref : (1, Cout, TS)  output
    acc = jnp.dot(w_ref[...], x_ref[0], preferred_element_type=jnp.float32)
    acc = acc + sh_ref[...]                      # broadcast (Cout,1) over lanes
    o_ref[0] = jnp.maximum(acc, 0.0).astype(o_ref.dtype)


def _choose_spatial_tile(S, N, Cin, Cout, x_itemsize, out_itemsize,
                         max_spatial_tile):
    """Pick a lane-dense spatial tile (multiple of 128)."""
    ts = min(max_spatial_tile, _round_up(S, 128))
    # Double-buffered x + out blocks must fit comfortably in v7x's scoped VMEM
    # (64 MiB physical / 32 MiB scoped default) -> budget ~24 MiB.
    budget_bytes = 24 * 1024 * 1024
    bytes_per_lane = 2 * (Cin * x_itemsize + Cout * out_itemsize)
    vmem_cap = max(128, (budget_bytes // bytes_per_lane) // 128 * 128)
    ts = min(ts, vmem_cap)
    # When N == 1, keep >= 2 grid blocks so both v7x TensorCores get work.
    if N == 1 and S > 128:
        ts = min(ts, max(128, _round_up(pl.cdiv(S, 2), 128)))
    return ts


# ----------------------------------------------------------------------------
# Wrapper: NCDHW in, NCDHW out (PyTorch layout) — no transposes, no pad/slice
# ----------------------------------------------------------------------------
def unet_grid_gating_signal3_forward(params, x_ncdhw, *, is_batchnorm=True,
                                     eps=1e-5, max_spatial_tile=2048,
                                     out_dtype=None):
    """Forward pass of UnetGridGatingSignal3 on an NCDHW input."""
    N, Cin, D, H, W = x_ncdhw.shape
    w = params["w"]                      # (Cout, Cin) from Conv3d (Cout,Cin,1,1,1)
    Cout = w.shape[0]

    # Fold conv bias + BatchNorm(eval, running stats) into scale/shift; fold
    # the scale into the weights so the kernel epilogue is add + ReLU only.
    # TODO(synk): training-mode BN (batch statistics + running-stat updates) is
    # not modeled; eval-mode running-stats semantics are used (identity at
    # default init).
    if is_batchnorm:
        inv_std = 1.0 / jnp.sqrt(params["running_var"].astype(jnp.float32) + eps)
        scale = params["gamma"].astype(jnp.float32) * inv_std
        shift = (params["beta"].astype(jnp.float32)
                 + (params["b"].astype(jnp.float32)
                    - params["running_mean"].astype(jnp.float32)) * scale)
    else:
        scale = jnp.ones((Cout,), jnp.float32)
        shift = params["b"].astype(jnp.float32)

    x_dtype = x_ncdhw.dtype
    out_dtype = x_dtype if out_dtype is None else out_dtype

    # Fold scale into the (tiny) weights in f32, then match the input dtype so
    # the MXU picks the bf16 path automatically when activations are bf16.
    w_scaled = (w.astype(jnp.float32) * scale[:, None]).astype(x_dtype)
    sh2 = shift.reshape(Cout, 1).astype(jnp.float32)

    S = D * H * W
    x3 = x_ncdhw.reshape(N, Cin, S)              # keep native dtype, no upcast

    TS = _choose_spatial_tile(S, N, Cin, Cout,
                              jnp.dtype(x_dtype).itemsize,
                              jnp.dtype(out_dtype).itemsize,
                              max_spatial_tile)
    grid = (N, pl.cdiv(S, TS))                   # partial last block is masked

    out = pl.pallas_call(
        _gating_kernel,
        out_shape=jax.ShapeDtypeStruct((N, Cout, S), out_dtype),
        grid=grid,
        in_specs=[
            pl.BlockSpec((1, Cin, TS), lambda n, s: (n, 0, s)),
            pl.BlockSpec((Cout, Cin), lambda n, s: (0, 0)),
            pl.BlockSpec((Cout, 1), lambda n, s: (0, 0)),
        ],
        out_specs=pl.BlockSpec((1, Cout, TS), lambda n, s: (n, 0, s)),
        compiler_params=pltpu.CompilerParams(
            dimension_semantics=("parallel", "parallel")),
    )(x3, w_scaled, sh2)

    return out.reshape(N, Cout, D, H, W)


# ----------------------------------------------------------------------------
# Parameter init (PyTorch defaults — in the reference module the Kaiming
# re-init iterates over self.children(), which only yields the nn.Sequential
# wrapper, so it is a no-op and PyTorch default inits remain: Conv3d
# uniform(-1/sqrt(fan_in), ...), BN gamma=1 / beta=0).
# ----------------------------------------------------------------------------
def init_unet_grid_gating_signal3(key, in_size, out_size, *,
                                  kernel_size=(1, 1, 1), is_batchnorm=True):
    assert tuple(kernel_size) == (1, 1, 1), \
        "only the (1,1,1) gating-signal kernel is implemented"
    # TODO(synk): general Conv3d kernel sizes are not implemented (the module
    # is only instantiated with kernel_size=(1,1,1) as the gating signal).
    kw, kb = jax.random.split(key)
    fan_in = in_size  # in_size * prod(kernel_size) == in_size
    bound = 1.0 / float(fan_in) ** 0.5
    params = {
        "w": jax.random.uniform(kw, (out_size, in_size), jnp.float32, -bound, bound),
        "b": jax.random.uniform(kb, (out_size,), jnp.float32, -bound, bound),
    }
    if is_batchnorm:
        params.update(
            gamma=jnp.ones((out_size,), jnp.float32),
            beta=jnp.zeros((out_size,), jnp.float32),
            running_mean=jnp.zeros((out_size,), jnp.float32),
            running_var=jnp.ones((out_size,), jnp.float32),
        )
    return params


# ----------------------------------------------------------------------------
def _ref_forward(params, x, *, is_batchnorm=True, eps=1e-5):
    """Plain-JAX f32 reference."""
    N, Cin, D, H, W = x.shape
    Cout = params["w"].shape[0]
    if is_batchnorm:
        scale = params["gamma"] / jnp.sqrt(params["running_var"] + eps)
        shift = params["beta"] + (params["b"] - params["running_mean"]) * scale
    else:
        scale = jnp.ones_like(params["b"])
        shift = params["b"]
    y = jnp.einsum("oc,ncs->nos", params["w"], x.reshape(N, Cin, -1),
                   precision=jax.lax.Precision.HIGHEST)
    y = jnp.maximum(y * scale[None, :, None] + shift[None, :, None], 0.0)
    return y.reshape(N, Cout, D, H, W)


if __name__ == "__main__":
    key = jax.random.PRNGKey(0)
    in_size, out_size = 8, 16
    B, D, H, W = 2, 4, 8, 8

    kp, kx, kx_odd = jax.random.split(key, 3)
    params = init_unet_grid_gating_signal3(kp, in_size, out_size,
                                           is_batchnorm=True)

    # Main check: spatial size divisible by the tile.
    x = jax.random.normal(kx, (B, in_size, D, H, W), jnp.float32)
    out = jax.block_until_ready(
        unet_grid_gating_signal3_forward(params, x, is_batchnorm=True))
    assert out.shape == (B, out_size, D, H, W), out.shape
    assert bool(jnp.all(jnp.isfinite(out)))
    assert bool(jnp.all(out >= 0.0))             # ReLU output is non-negative
    ref = _ref_forward(params, x, is_batchnorm=True)
    assert bool(jnp.allclose(out, ref, atol=1e-2, rtol=1e-2)), \
        float(jnp.max(jnp.abs(out - ref)))

    # Partial-block check: S = 3*5*7 = 105 (not a multiple of 128) — exercises
    # the masked last-block path with no wrapper pad/slice.
    x_odd = jax.random.normal(kx_odd, (1, in_size, 3, 5, 7), jnp.float32)
    out_odd = jax.block_until_ready(
        unet_grid_gating_signal3_forward(params, x_odd, is_batchnorm=True))
    assert out_odd.shape == (1, out_size, 3, 5, 7), out_odd.shape
    ref_odd = _ref_forward(params, x_odd, is_batchnorm=True)
    assert bool(jnp.all(jnp.isfinite(out_odd)))
    assert bool(jnp.allclose(out_odd, ref_odd, atol=1e-2, rtol=1e-2)), \
        float(jnp.max(jnp.abs(out_odd - ref_odd)))

    print("KERNEL_OK")
</pallas_src>

<mosaic_0001>
module attributes {stable_mosaic.version = 11 : i64} {
  func.func @_gating_kernel(%arg0: i32, %arg1: i32, %arg2: memref<1x8x256xf32, #tpu.memory_space<vmem>>, %arg3: memref<16x8xf32, #tpu.memory_space<vmem>>, %arg4: memref<16x1xf32, #tpu.memory_space<vmem>>, %arg5: memref<1x16x256xf32, #tpu.memory_space<vmem>>) attributes {dimension_semantics = [#tpu.dimension_semantics<parallel>, #tpu.dimension_semantics<parallel>], iteration_bounds = array<i64: 2, 1>, scalar_prefetch = 0 : i64, scratch_operands = 0 : i64, tpu.core_type = #tpu.core_type<tc>, window_params = [{transform_indices = @transform_0, window_bounds = array<i64: 1, 8, 256>}, {pipeline_mode = #tpu.pipeline_mode<synchronous>, transform_indices = @transform_1, window_bounds = array<i64: 16, 8>}, {pipeline_mode = #tpu.pipeline_mode<synchronous>, transform_indices = @transform_2, window_bounds = array<i64: 16, 1>}, {transform_indices = @transform_3, window_bounds = array<i64: 1, 16, 256>}]} {
    %c0 = arith.constant 0 : index
    %c0_0 = arith.constant 0 : index
    %0 = vector.load %arg3[%c0, %c0_0] : memref<16x8xf32, #tpu.memory_space<vmem>>, vector<16x8xf32>
    %c0_1 = arith.constant 0 : index
    %c0_2 = arith.constant 0 : index
    %c0_3 = arith.constant 0 : index
    %1 = vector.load %arg2[%c0_1, %c0_2, %c0_3] : memref<1x8x256xf32, #tpu.memory_space<vmem>>, vector<1x8x256xf32>
    %2 = vector.shape_cast %1 : vector<1x8x256xf32> to vector<8x256xf32>
    %cst = arith.constant dense<0.000000e+00> : vector<16x256xf32>
    %3 = tpu.matmul %0, %2, %cst {dimension_numbers = #tpu.dot_dimension_numbers<[1], [0], [0], [1], [0, 0, 1, 1], [], []>} : vector<16x8xf32>, vector<8x256xf32>, vector<16x256xf32> -> vector<16x256xf32>
    %c0_4 = arith.constant 0 : index
    %c0_5 = arith.constant 0 : index
    %4 = vector.load %arg4[%c0_4, %c0_5] : memref<16x1xf32, #tpu.memory_space<vmem>>, vector<16x1xf32>
    %5 = vector.broadcast %4 : vector<16x1xf32> to vector<16x256xf32>
    %6 = arith.addf %3, %5 : vector<16x256xf32>
    %cst_6 = arith.constant 0.000000e+00 : f32
    %7 = vector.broadcast %cst_6 : f32 to vector<16x256xf32>
    %8 = arith.maximumf %6, %7 : vector<16x256xf32>
    %c0_7 = arith.constant 0 : index
    %c0_8 = arith.constant 0 : index
    %c0_9 = arith.constant 0 : index
    %9 = vector.load %arg5[%c0_7, %c0_8, %c0_9] : memref<1x16x256xf32, #tpu.memory_space<vmem>>, vector<1x16x256xf32>
    %10 = vector.shape_cast %9 : vector<1x16x256xf32> to vector<16x256xf32>
    %11 = vector.shape_cast %8 : vector<16x256xf32> to vector<1x16x256xf32>
    tpu.vector_store %arg5[%c0_7, %c0_8, %c0_9], %11 {strides = array<i32>} : memref<1x16x256xf32, #tpu.memory_space<vmem>>, vector<1x16x256xf32>,
    return
  }
  func.func @transform_0(%arg0: i32, %arg1: i32) -> (i32, i32, i32) {
    %c0_i32 = arith.constant 0 : i32
    %c0_i32_0 = arith.constant 0 : i32
    return %arg0, %c0_i32, %arg1 : i32, i32, i32
  }
  func.func @transform_1(%arg0: i32, %arg1: i32) -> (i32, i32) {
    %c0_i32 = arith.constant 0 : i32
    %c0_i32_0 = arith.constant 0 : i32
    %c0_i32_1 = arith.constant 0 : i32
    return %c0_i32, %c0_i32_0 : i32, i32
  }
  func.func @transform_2(%arg0: i32, %arg1: i32) -> (i32, i32) {
    %c0_i32 = arith.constant 0 : i32
    %c0_i32_0 = arith.constant 0 : i32
    %c0_i32_1 = arith.constant 0 : i32
    return %c0_i32, %c0_i32_0 : i32, i32
  }
  func.func @transform_3(%arg0: i32, %arg1: i32) -> (i32, i32, i32) {
    %c0_i32 = arith.constant 0 : i32
    %c0_i32_0 = arith.constant 0 : i32
    return %arg0, %c0_i32, %arg1 : i32, i32, i32
  }
}

</mosaic_0001>

<llo_original>
// kernel: tpu_custom_call.1
$region0: #{tpu_custom_call.1}
  #allocation0 [shape = 'u32[]', space=smem, size = 0x4, offset = 0x4, fixed_abs, tag = 'smem constant byte address 0x4 - core index']
  #allocation1 [shape = 'u32[72,128]{1,0:T(1,128)}', space=vmem, size = 0x9000, scoped, tag = 'internal scratch']
  %s0 = inlined_call_operand.vmem [shape: f32[2,8,256], index: 0, kind: input, shape index: {}]
  %s1 = inlined_call_operand.vmem [shape: f32[16,8], index: 1, kind: input, shape index: {}]
  %s2 = inlined_call_operand.vmem [shape: f32[16,1], index: 2, kind: input, shape index: {}]
  %s3 = inlined_call_operand.hbm [shape: f32[2,16,256], index: 3, kind: output, shape index: {}]
  %s4 = sld [smem:[#allocation0]]
  $region45: #{tpu_custom_call.1} parent=0
    _
  %s6 = ssub.s32 1, %s4
  %s7 = scalar_select 0, %s6, %s4
  $region1: #{tpu_custom_call.1} parent=0
    #allocation2 [shape = 'u8[32768]{0}', space=vmem, size = 0x8000, scoped, tag = 'output window, operand 0']
    #allocation3 [shape = 's32[2]{0}', space=sflag, size = 0x8, scoped, tag = 'scoped memory for tpu_custom_call.1']
    %8 = vsyncpa [#allocation3], 0
    %s9 = scalar_lea.sflag [#allocation3], 1
    %10 = vsyncpa %s9, 0
    loop: start=0, step=1, limit=4
    $region2: #{tpu_custom_call.1} parent=1 // loop_pre_header
      _
    $region3: #{tpu_custom_call.1} parent=1 // loop_header
      %s12 = sphi 0, %s16
      %p13 = scmp.ge.s32.totalorder %s12, 4
      %s19 = sphi 0, %s31
      %s20 = sphi 0, %s27
      %s21 = sphi 0, %s19
      %s22 = sphi 0, %s20
      %s23 = sphi 0, %s21
      %s24 = sphi 0, %s22
      %s36 = sphi 0, %s38
      %s39 = sphi 0, %s36
      %s40 = sphi 0, %s39
      %s56 = sphi 0, %s40
      %s60 = sphi 0, %s60
      %s62 = sphi 0, %s60
      %s63 = sphi 0, %s62
      %s77 = sphi 0, %s63
      %s81 = sphi 0, %s81
      %s83 = sphi 0, %s81
      %s84 = sphi 0, %s83
      %s98 = sphi 0, %s84
      %s106 = sphi 0, %s108
      %s109 = sphi 0, %s106
      %s110 = sphi 0, %s109
      %s126 = sphi 0, %s110
    $region4: #{tpu_custom_call.1} parent=1 // loop_header_branch
      %15 = sbr.rel (%p13) target = $region8
    $region5: #{tpu_custom_call.1} parent=1 // loop_body
      %s17 = ssub.s32 %s12, 1
      %s18 = ssub.s32 %s12, 2
      %s25 = sadd.s32 1, %s20
      %p26 = scmp.ge.s32.totalorder %s25, 1
      %s27 = scalar_select %p26, 0, %s25
      %s28 = sadd.s32 1, %s19
      %s29 = scalar_select %p26, %s28, %s19
      %p30 = scmp.ge.s32.totalorder %s29, 2
      %s31 = scalar_select %p30, 0, %s29
      %s32 = ssub.s32 %s19, %s31
      %s33 = ssub.s32 %s20, %s27
      %s34 = sor.u32 %s32, %s33
      %p35 = scmp.eq.s32.totalorder %s34, 0
      %s37 = sadd.s32 %s36, 1
      %s38 = scalar_select %p35, %s36, %s37
      %p41 = pneg %p35
      %p42 = scmp.eq.s32.totalorder %s12, 1
      %p43 = por %p41, %p42
      %p44 = scmp.ne.s32.totalorder %s36, %s39
      %p45 = scmp.eq.s32.totalorder %s12, 0
      %p46 = por %p44, %p45
      %p47 = scmp.ne.s32.totalorder %s36, %s39
      %p48 = scmp.eq.s32.totalorder %s17, 1
      %p49 = por %p47, %p48
      %p50 = scmp.ne.s32.totalorder %s39, %s40
      %p51 = scmp.eq.s32.totalorder %s17, 0
      %p52 = por %p50, %p51
      %p53 = scmp.ne.s32.totalorder %s39, %s40
      %p54 = scmp.eq.s32.totalorder %s18, 1
      %p55 = por %p53, %p54
      %p57 = scmp.ne.s32.totalorder %s40, %s56
      %p58 = scmp.eq.s32.totalorder %s18, 0
      %p59 = por %p57, %p58
      %s61 = sadd.s32 %s60, 1
      %p64 = scmp.eq.s32.totalorder %s12, 1
      %p65 = scmp.ne.s32.totalorder %s60, %s62
      %p66 = scmp.eq.s32.totalorder %s12, 0
      %p67 = por %p65, %p66
      %p68 = scmp.ne.s32.totalorder %s60, %s62
      %p69 = scmp.eq.s32.totalorder %s17, 1
      %p70 = por %p68, %p69
      %p71 = scmp.ne.s32.totalorder %s62, %s63
      %p72 = scmp.eq.s32.totalorder %s17, 0
      %p73 = por %p71, %p72
      %p74 = scmp.ne.s32.totalorder %s62, %s63
      %p75 = scmp.eq.s32.totalorder %s18, 1
      %p76 = por %p74, %p75
      %p78 = scmp.ne.s32.totalorder %s63, %s77
      %p79 = scmp.eq.s32.totalorder %s18, 0
      %p80 = por %p78, %p79
      %s82 = sadd.s32 %s81, 1
      %p85 = scmp.eq.s32.totalorder %s12, 1
      %p86 = scmp.ne.s32.totalorder %s81, %s83
      %p87 = scmp.eq.s32.totalorder %s12, 0
      %p88 = por %p86, %p87
      %p89 = scmp.ne.s32.totalorder %s81, %s83
      %p90 = scmp.eq.s32.totalorder %s17, 1
      %p91 = por %p89, %p90
      %p92 = scmp.ne.s32.totalorder %s83, %s84
      %p93 = scmp.eq.s32.totalorder %s17, 0
      %p94 = por %p92, %p93
      %p95 = scmp.ne.s32.totalorder %s83, %s84
      %p96 = scmp.eq.s32.totalorder %s18, 1
      %p97 = por %p95, %p96
      %p99 = scmp.ne.s32.totalorder %s84, %s98
      %p100 = scmp.eq.s32.totalorder %s18, 0
      %p101 = por %p99, %p100
      %s102 = ssub.s32 %s19, %s31
      %s103 = ssub.s32 %s20, %s27
      %s104 = sor.u32 %s102, %s103
      %p105 = scmp.eq.s32.totalorder %s104, 0
      %s107 = sadd.s32 %s106, 1
      %s108 = scalar_select %p105, %s106, %s107
      %p111 = pneg %p105
      %p112 = scmp.eq.s32.totalorder %s12, 1
      %p113 = por %p111, %p112
      %p114 = scmp.ne.s32.totalorder %s106, %s109
      %p115 = scmp.eq.s32.totalorder %s12, 0
      %p116 = por %p114, %p115
      %p117 = scmp.ne.s32.totalorder %s106, %s109
      %p118 = scmp.eq.s32.totalorder %s17, 1
      %p119 = por %p117, %p118
      %p120 = scmp.ne.s32.totalorder %s109, %s110
      %p121 = scmp.eq.s32.totalorder %s17, 0
      %p122 = por %p120, %p121
      %p123 = scmp.ne.s32.totalorder %s109, %s110
      %p124 = scmp.eq.s32.totalorder %s18, 1
      %p125 = por %p123, %p124
      %p127 = scmp.ne.s32.totalorder %s110, %s126
      %p128 = scmp.eq.s32.totalorder %s18, 0
      %p129 = por %p127, %p128
      %p130 = scmp.le.s32.totalorder 1, %s12
      %p131 = scmp.lt.s32.totalorder %s12, 3
      %p132 = pnand %p130, %p131
      %p133 = pneg %p132
      // Predicated region
      $region9: #{tpu_custom_call.1} parent=5 // pred_check
        _
      $region10: #{tpu_custom_call.1} parent=5 // pred_check_branch
        %135 = sbr.rel (%p132) target = $region12
      $region11: #{tpu_custom_call.1} parent=5 // pred_region
        %s136 = ssub.s32 %s12, 1
        // Predicated region
        $region13: #{tpu_custom_call.1} parent=11 // pred_check
          %p137 = pneg %p73
        $region14: #{tpu_custom_call.1} parent=11 // pred_check_branch
          %139 = sbr.rel (%p137) target = $region16
        $region15: #{tpu_custom_call.1} parent=11 // pred_region
          _
        $region16: #{tpu_custom_call.1} parent=11 // pred_fallthru
          _
        // Predicated region
        $region17: #{tpu_custom_call.1} parent=11 // pred_check
          %p140 = pneg %p94
        $region18: #{tpu_custom_call.1} parent=11 // pred_check_branch
          %142 = sbr.rel (%p140) target = $region20
        $region19: #{tpu_custom_call.1} parent=11 // pred_region
          _
        $region20: #{tpu_custom_call.1} parent=11 // pred_fallthru
          _
      $region12: #{tpu_custom_call.1} parent=5 // pred_fallthru
        _
      %p143 = scmp.lt.s32.totalorder %s12, 2
      // Predicated region
      $region21: #{tpu_custom_call.1} parent=5 // pred_check
        %p144 = pneg %p143
      $region22: #{tpu_custom_call.1} parent=5 // pred_check_branch
        %146 = sbr.rel (%p144) target = $region24
      $region23: #{tpu_custom_call.1} parent=5 // pred_region
        // Predicated region
        $region25: #{tpu_custom_call.1} parent=23 // pred_check
          %p147 = pneg %p46
        $region26: #{tpu_custom_call.1} parent=23 // pred_check_branch
          %149 = sbr.rel (%p147) target = $region28
        $region27: #{tpu_custom_call.1} parent=23 // pred_region
          %s150 = smul.u32 2, %s20
          %p151 = scmp.lt.s32.totalorder %s19, 1
          %s152 = scalar_select %p151, %s19, 1
          %p153 = scmp.lt.s32.totalorder %s150, 1
          %s154 = scalar_select %p153, %s150, 1
          %s155 = smul.addr %s152, 2
          %s156 = sadd.s32 %s154, %s155
          %s157 = smul.addr %s156, 8
          %s158 = scalar_lea.vmem %s0, %s157
          %s159 = smul.u32 2, %s20
        $region28: #{tpu_custom_call.1} parent=23 // pred_fallthru
          _
      $region24: #{tpu_custom_call.1} parent=5 // pred_fallthru
        _
      %p160 = scmp.le.s32.totalorder 1, %s12
      %p161 = scmp.lt.s32.totalorder %s12, 3
      %p162 = pnand %p160, %p161
      %p163 = pneg %p162
      // Predicated region
      $region29: #{tpu_custom_call.1} parent=5 // pred_check
        _
      $region30: #{tpu_custom_call.1} parent=5 // pred_check_branch
        %165 = sbr.rel (%p162) target = $region32
      $region31: #{tpu_custom_call.1} parent=5 // pred_region
        %s166 = ssub.s32 %s12, 1
        %s167 = smul.u32 2, %s22
        %p168 = scmp.lt.s32.totalorder %s21, 1
        %s169 = scalar_select %p168, %s21, 1
        %p170 = scmp.lt.s32.totalorder %s167, 1
        %s171 = scalar_select %p170, %s167, 1
        %s172 = smul.addr %s169, 2
        %s173 = sadd.s32 %s171, %s172
        %s174 = smul.addr %s173, 8
        %s175 = scalar_lea.vmem %s0, %s174
        %p176 = pneg %p52
        %p177 = pneg %p49
        %p178 = pneg %p73
        %p179 = pneg %p70
        %p180 = pneg %p94
        %p181 = pneg %p91
        %p182 = pneg %p122
        %p183 = pneg %p119
        %s184 = sand.u32 %s109, 1
        %s185 = scalar_lea.sflag [#allocation3], %s184
        %s186 = sand.u32 %s109, 1
        %s187 = smul.addr %s186, 32
        %s188 = scalar_lea.vmem [#allocation2], %s187
        %s189 = smul.u32 2, %s22
        %p190 = scmp.lt.s32.totalorder %s21, 1
        %s191 = scalar_select %p190, %s21, 1
        %p192 = scmp.lt.s32.totalorder %s189, 1
        %s193 = scalar_select %p192, %s189, 1
        %s194 = smul.addr %s191, 2
        %s195 = sadd.s32 %s193, %s194
        %s196 = smul.addr %s195, 8
        %s197 = scalar_lea.vmem %s0, %s196
        %s198 = smul.u32 2, %s22
        %s199 = smul.u32 2, %s22
        %v200 = vld [vmem:[%s1] sm:$0xff]
        %v201 = vld [vmem:[%s1 + $0x8] sm:$0xff]
        %v202 = vld [vmem:[%s197] sm:$0xff]
        %v203 = vld [vmem:[%s197 + $0x8] sm:$0xff]
        %v204 = vld [vmem:[%s2] sm:$0xff]
        %v205 = vld [vmem:[%s2 + $0x8] sm:$0xff]
        %207 = vset.pattern.permute.xlu0 0
        %208 = vperm.xlu0 %207, %v204
        %v209 = vpop.permute.xlu0 %208
        %212 = vset.pattern.permute.xlu0 0
        %213 = vperm.xlu0 %212, %v205
        %v214 = vpop.permute.xlu0 %213
        %vm216 = vcmask 64512
        %v218 = vsel %vm216, %v200, 0
        %v221 = vsel %vm216, %v201, 0
        %223 = vmatpush.msra.mxu0 0.0
        %224 = vmatpush.msra.mxu0 0.0
        %225 = vmatpush.msra.mxu0 0.0
        %226 = vmatpush.msra.mxu0 0.0
        %227 = vmatpush.msra.mxu0 0.0
        %228 = vmatpush.msra.mxu0 0.0
        %229 = vmatpush.msra.mxu0 0.0
        %230 = vmatpush.msra.mxu0 0.0
        %231 = vmatpush.msra.mxu0 0.0
        %232 = vmatpush.msra.mxu0 0.0
        %233 = vmatpush.msra.mxu0 0.0
        %234 = vmatpush.msra.mxu0 0.0
        %235 = vmatpush.msra.mxu0 0.0
        %236 = vmatpush.msra.mxu0 0.0
        %237 = vmatpush.msra.mxu0 0.0
        %238 = vmatpush.msra.mxu0 %v202
        %239 = vmatmul.f32.gmra.mxu0 %v218
        %v240 = vpop.f32.mrf.mxu0
        %v241 = vadd.f32 %v209, %v240
        %242 = vmatmul.f32.gmra.mxu0 %v221
        %v243 = vpop.f32.mrf.mxu0
        %v244 = vadd.f32 %v214, %v243
        %245 = vdwg.mxu0
        %246 = vmatpush.msra.mxu0 0.0
        %247 = vmatpush.msra.mxu0 0.0
        %248 = vmatpush.msra.mxu0 0.0
        %249 = vmatpush.msra.mxu0 0.0
        %250 = vmatpush.msra.mxu0 0.0
        %251 = vmatpush.msra.mxu0 0.0
        %252 = vmatpush.msra.mxu0 0.0
        %253 = vmatpush.msra.mxu0 0.0
        %254 = vmatpush.msra.mxu0 0.0
        %255 = vmatpush.msra.mxu0 0.0
        %256 = vmatpush.msra.mxu0 0.0
        %257 = vmatpush.msra.mxu0 0.0
        %258 = vmatpush.msra.mxu0 0.0
        %259 = vmatpush.msra.mxu0 0.0
        %260 = vmatpush.msra.mxu0 0.0
        %261 = vmatpush.msra.mxu0 %v203
        %262 = vmatmul.f32.gmra.mxu0 %v218
        %v263 = vpop.f32.mrf.mxu0
        %v264 = vadd.f32 %v209, %v263
        %265 = vmatmul.f32.gmra.mxu0 %v221
        %v266 = vpop.f32.mrf.mxu0
        %v267 = vadd.f32 %v214, %v266
        %268 = vdwg.mxu0
        %v269 = vmax.f32 %v241, 0.0
        %v270 = vmax.f32 %v264, 0.0
        %v271 = vmax.f32 %v244, 0.0
        %v272 = vmax.f32 %v267, 0.0
        %273 = vst [vmem:[%s188] sm:$0xff] %v269
        %274 = vst [vmem:[%s188 + $0x8] sm:$0xff] %v270
        %275 = vst [vmem:[%s188 + $0x10] sm:$0xff] %v271
        %276 = vst [vmem:[%s188 + $0x18] sm:$0xff] %v272
        %s277 = sand.u32 %s109, 1
        %s278 = scalar_lea.sflag [#allocation3], %s277
        %s279 = sand.u32 %s109, 1
        %s280 = smul.addr %s279, 32
        %s281 = scalar_lea.vmem [#allocation2], %s280
        // Predicated region
        $region33: #{tpu_custom_call.1} parent=31 // pred_check
          %p282 = pneg %p119
        $region34: #{tpu_custom_call.1} parent=31 // pred_check_branch
          %284 = sbr.rel (%p282) target = $region36
        $region35: #{tpu_custom_call.1} parent=31 // pred_region
          %s285 = smul.u32 2, %s22
          %287 = vsyncadd %s278, 0
          %s288 = smul.addr %s21, 4
          %s289 = sadd.s32 %s285, %s288
          %s290 = smul.addr %s289, 8
          %s291 = scalar_lea.hbm %s3, %s290
          %s292 = sshll.u32 %s281, 4
          %s293 = int_to_ptr.vmem [resolvable:$true] %s292
          %s294 = sshll.u32 %s291, 4
          %s295 = int_to_ptr.hbm [resolvable:$true] %s294
          %300 = dma.vmem_to_hbm [thread:$0]  %s293, 512, %s295, %s278, 256, 256, 16
        $region36: #{tpu_custom_call.1} parent=31 // pred_fallthru
          _
      $region32: #{tpu_custom_call.1} parent=5 // pred_fallthru
        _
      %p301 = scmp.le.s32.totalorder 2, %s12
      // Predicated region
      $region37: #{tpu_custom_call.1} parent=5 // pred_check
        %p302 = pneg %p301
      $region38: #{tpu_custom_call.1} parent=5 // pred_check_branch
        %304 = sbr.rel (%p302) target = $region40
      $region39: #{tpu_custom_call.1} parent=5 // pred_region
        %s305 = ssub.s32 %s12, 2
        // Predicated region
        $region41: #{tpu_custom_call.1} parent=39 // pred_check
          %p306 = pneg %p125
        $region42: #{tpu_custom_call.1} parent=39 // pred_check_branch
          %308 = sbr.rel (%p306) target = $region44
        $region43: #{tpu_custom_call.1} parent=39 // pred_region
          %s309 = sand.u32 %s110, 1
          %s310 = scalar_lea.sflag [#allocation3], %s309
          %s311 = sand.u32 %s110, 1
          %s312 = smul.addr %s311, 32
          %s313 = scalar_lea.vmem [#allocation2], %s312
          %315 = dma.done %s310, 512
        $region44: #{tpu_custom_call.1} parent=39 // pred_fallthru
          _
      $region40: #{tpu_custom_call.1} parent=5 // pred_fallthru
        _
    $region6: #{tpu_custom_call.1} parent=1 // loop_footer
      %s16 = sadd.s32 1, %s12
    $region7: #{tpu_custom_call.1} parent=1 // loop_footer_branch
      %11 = sbr.rel target = $region3
    $region8: #{tpu_custom_call.1} parent=1 // loop_exit
      _
    %316 = vsyncpa [#allocation3], 1
    %s317 = scalar_lea.sflag [#allocation3], 1
    %318 = vsyncpa %s317, 1

</llo_original>
